<compile_context>
chip_gen: v5e
topology: v5e:2x2
jax: 0.10.0
libtpu: 0.0.40
codegen_flags: <defaults>
</compile_context>

<pallas_src>
import jax
import jax.numpy as jnp
from jax.experimental import pallas as pl
from jax.experimental.pallas import tpu as pltpu

IN_FEATURES = 28 * 28      # 784
HIDDEN = 128
OUT_FEATURES = 10
OUT_PADDED = 128           # lane-dense output width (cols 10..127 are zeros)


def _round_up(n, m):
    return ((n + m - 1) // m) * m


def _default_tb():
    """2048 everywhere; 4096 on v7x (3.2 TB/s HBM makes per-step overhead dominate)."""
    try:
        kind = jax.devices()[0].device_kind.lower()
        if "v7" in kind:
            return 4096
    except Exception:
        pass
    return 2048


def mlp_kernel(x_ref, w1_ref, b1_ref, w2_ref, b2_ref, o_ref):
    # In-kernel cast (VPU work rides free under the DMA/MXU); avoids a separate
    # un-fused XLA cast pass over x in HBM.
    x = x_ref[...].astype(jnp.bfloat16)
    # fc1: (TB,784)bf16 @ (784,128)bf16 -> f32 acc, +bias, ReLU (in-register)
    h = jnp.dot(x, w1_ref[...], preferred_element_type=jnp.float32)
    h = jnp.maximum(h + b1_ref[...], 0.0)
    # fc2: (TB,128)bf16 @ (128,128)bf16 -> f32 acc, +bias (padded to 128 lanes)
    y = jnp.dot(h.astype(jnp.bfloat16), w2_ref[...],
                preferred_element_type=jnp.float32)
    # bf16 writeback halves output HBM traffic; wrapper upcasts to f32 logits.
    o_ref[...] = (y + b2_ref[...]).astype(o_ref.dtype)


def simple_nn_forward(x, w1, b1, w2, b2, *, tb=None):
    """x: (B, C, H, W) or (B, 784). Flattens to (B, 784) like x.view(-1, 784).

    Returns (B, 10) f32 logits.
    """
    x2 = x.reshape(-1, IN_FEATURES)          # keep caller dtype; cast in kernel
    B = x2.shape[0]

    if tb is None:
        tb = _default_tb()
    # Batch tile: multiple of 8 sublanes, no larger than needed for tiny batches.
    TB = min(tb, _round_up(B, 8))
    grid = (pl.cdiv(B, TB),)                 # partial last tile handled by OOB masking

    # bf16 weights (f32 biases); pad fc2 to a lane-dense 128-wide output.
    w1b = w1.astype(jnp.bfloat16)
    b1f = b1.astype(jnp.float32).reshape(1, HIDDEN)
    w2p = jnp.pad(w2.reshape(HIDDEN, OUT_FEATURES),
                  ((0, 0), (0, OUT_PADDED - OUT_FEATURES))).astype(jnp.bfloat16)
    b2p = jnp.pad(b2.astype(jnp.float32).reshape(1, OUT_FEATURES),
                  ((0, 0), (0, OUT_PADDED - OUT_FEATURES)))

    # Scoped-VMEM budget: 2 x-bufs (lane-padded 784->896, caller dtype) +
    # 2 bf16 out-bufs + resident weights, plus slack. Capped well under the
    # smallest physical VMEM (v7x: 64 MiB/TC).
    x_bytes = x2.dtype.itemsize
    vmem_est = (2 * TB * 896 * x_bytes            # double-buffered x tiles
                + 2 * TB * OUT_PADDED * 2         # double-buffered bf16 out tiles
                + (1 << 20))                      # weights/biases + misc
    vmem_limit = min(vmem_est + (8 << 20), 56 << 20)

    out = pl.pallas_call(
        mlp_kernel,
        out_shape=jax.ShapeDtypeStruct((B, OUT_PADDED), jnp.bfloat16),
        grid_spec=pltpu.PrefetchScalarGridSpec(
            num_scalar_prefetch=0,
            grid=grid,
            in_specs=[
                # x streams per batch tile; weights/biases stay VMEM-resident.
                pl.BlockSpec((TB, IN_FEATURES), lambda i: (i, 0)),
                pl.BlockSpec((IN_FEATURES, HIDDEN), lambda i: (0, 0)),
                pl.BlockSpec((1, HIDDEN), lambda i: (0, 0)),
                pl.BlockSpec((HIDDEN, OUT_PADDED), lambda i: (0, 0)),
                pl.BlockSpec((1, OUT_PADDED), lambda i: (0, 0)),
            ],
            out_specs=pl.BlockSpec((TB, OUT_PADDED), lambda i: (i, 0)),
        ),
        compiler_params=pltpu.CompilerParams(
            dimension_semantics=("parallel",),   # v7x: shard batch tiles across 2 TCs
            vmem_limit_bytes=vmem_limit,
        ),
    )(x2, w1b, b1f, w2p, b2p)

    return out[:, :OUT_FEATURES].astype(jnp.float32)


def init_params(key):
    """Deterministic init mimicking PyTorch nn.Linear default (uniform +/-1/sqrt(fan_in))."""
    k1, k2, k3, k4 = jax.random.split(key, 4)
    bound1 = 1.0 / jnp.sqrt(float(IN_FEATURES))
    bound2 = 1.0 / jnp.sqrt(float(HIDDEN))
    # stored as (in, out): transpose of PyTorch's (out, in)
    w1 = jax.random.uniform(k1, (IN_FEATURES, HIDDEN), jnp.float32, -bound1, bound1)
    b1 = jax.random.uniform(k2, (1, HIDDEN), jnp.float32, -bound1, bound1)
    w2 = jax.random.uniform(k3, (HIDDEN, OUT_FEATURES), jnp.float32, -bound2, bound2)
    b2 = jax.random.uniform(k4, (1, OUT_FEATURES), jnp.float32, -bound2, bound2)
    return w1, b1, w2, b2


if __name__ == "__main__":
    key = jax.random.PRNGKey(0)
    kx, kp = jax.random.split(key)

    # Small batch of MNIST-shaped inputs (B, 1, 28, 28) in NCHW, as the module implies.
    # B=10 is deliberately not a multiple of the sublane-rounded tile, exercising the
    # partial-last-tile (OOB-masking) path.
    x = jax.random.normal(kx, (10, 1, 28, 28), jnp.float32)
    w1, b1, w2, b2 = init_params(kp)

    out = simple_nn_forward(x, w1, b1, w2, b2)
    out = jax.block_until_ready(out)

    # Reference check in plain JAX (f32); tolerance loosened for bf16 x/W compute
    # and bf16 output writeback.
    x2 = x.reshape(-1, IN_FEATURES)
    ref = jnp.maximum(x2 @ w1 + b1, 0.0) @ w2 + b2
    assert out.shape == (10, OUT_FEATURES)
    assert jnp.allclose(out, ref, atol=3e-2, rtol=3e-2), (
        f"max abs diff {jnp.max(jnp.abs(out - ref))}")

    print("KERNEL_OK")
</pallas_src>

<mosaic_0001>
module attributes {stable_mosaic.version = 11 : i64} {
  func.func @mlp_kernel(%arg0: i32, %arg1: memref<16x784xf32, #tpu.memory_space<vmem>>, %arg2: memref<784x128xbf16, #tpu.memory_space<vmem>>, %arg3: memref<1x128xf32, #tpu.memory_space<vmem>>, %arg4: memref<128x128xbf16, #tpu.memory_space<vmem>>, %arg5: memref<1x128xf32, #tpu.memory_space<vmem>>, %arg6: memref<16x128xbf16, #tpu.memory_space<vmem>>) attributes {dimension_semantics = [#tpu.dimension_semantics<parallel>], iteration_bounds = array<i64: 1>, scalar_prefetch = 0 : i64, scratch_operands = 0 : i64, tpu.core_type = #tpu.core_type<tc>, window_params = [{transform_indices = @transform_0, window_bounds = array<i64: 16, 784>}, {pipeline_mode = #tpu.pipeline_mode<synchronous>, transform_indices = @transform_1, window_bounds = array<i64: 784, 128>}, {pipeline_mode = #tpu.pipeline_mode<synchronous>, transform_indices = @transform_2, window_bounds = array<i64: 1, 128>}, {pipeline_mode = #tpu.pipeline_mode<synchronous>, transform_indices = @transform_3, window_bounds = array<i64: 128, 128>}, {pipeline_mode = #tpu.pipeline_mode<synchronous>, transform_indices = @transform_4, window_bounds = array<i64: 1, 128>}, {transform_indices = @transform_5, window_bounds = array<i64: 16, 128>}]} {
    %c0 = arith.constant 0 : index
    %c0_0 = arith.constant 0 : index
    %0 = vector.load %arg1[%c0, %c0_0] : memref<16x784xf32, #tpu.memory_space<vmem>>, vector<16x784xf32>
    %1 = arith.truncf %0 : vector<16x784xf32> to vector<16x784xbf16>
    %c0_1 = arith.constant 0 : index
    %c0_2 = arith.constant 0 : index
    %2 = vector.load %arg2[%c0_1, %c0_2] : memref<784x128xbf16, #tpu.memory_space<vmem>>, vector<784x128xbf16>
    %cst = arith.constant dense<0.000000e+00> : vector<16x128xf32>
    %3 = tpu.matmul %1, %2, %cst {dimension_numbers = #tpu.dot_dimension_numbers<[1], [0], [0], [1], [0, 0, 1, 1], [], []>} : vector<16x784xbf16>, vector<784x128xbf16>, vector<16x128xf32> -> vector<16x128xf32>
    %c0_3 = arith.constant 0 : index
    %c0_4 = arith.constant 0 : index
    %4 = vector.load %arg3[%c0_3, %c0_4] : memref<1x128xf32, #tpu.memory_space<vmem>>, vector<1x128xf32>
    %5 = vector.broadcast %4 : vector<1x128xf32> to vector<16x128xf32>
    %6 = arith.addf %3, %5 : vector<16x128xf32>
    %cst_5 = arith.constant 0.000000e+00 : f32
    %7 = vector.broadcast %cst_5 : f32 to vector<16x128xf32>
    %8 = arith.maximumf %6, %7 : vector<16x128xf32>
    %9 = arith.truncf %8 : vector<16x128xf32> to vector<16x128xbf16>
    %c0_6 = arith.constant 0 : index
    %c0_7 = arith.constant 0 : index
    %10 = vector.load %arg4[%c0_6, %c0_7] : memref<128x128xbf16, #tpu.memory_space<vmem>>, vector<128x128xbf16>
    %cst_8 = arith.constant dense<0.000000e+00> : vector<16x128xf32>
    %11 = tpu.matmul %9, %10, %cst_8 {dimension_numbers = #tpu.dot_dimension_numbers<[1], [0], [0], [1], [0, 0, 1, 1], [], []>} : vector<16x128xbf16>, vector<128x128xbf16>, vector<16x128xf32> -> vector<16x128xf32>
    %c0_9 = arith.constant 0 : index
    %c0_10 = arith.constant 0 : index
    %12 = vector.load %arg5[%c0_9, %c0_10] : memref<1x128xf32, #tpu.memory_space<vmem>>, vector<1x128xf32>
    %13 = vector.broadcast %12 : vector<1x128xf32> to vector<16x128xf32>
    %14 = arith.addf %11, %13 : vector<16x128xf32>
    %15 = arith.truncf %14 : vector<16x128xf32> to vector<16x128xbf16>
    %c0_11 = arith.constant 0 : index
    %c0_12 = arith.constant 0 : index
    %16 = vector.load %arg6[%c0_11, %c0_12] : memref<16x128xbf16, #tpu.memory_space<vmem>>, vector<16x128xbf16>
    tpu.vector_store %arg6[%c0_11, %c0_12], %15 {strides = array<i32>} : memref<16x128xbf16, #tpu.memory_space<vmem>>, vector<16x128xbf16>,
    return
  }
  func.func @transform_0(%arg0: i32) -> (i32, i32) {
    %c0_i32 = arith.constant 0 : i32
    %c0_i32_0 = arith.constant 0 : i32
    return %arg0, %c0_i32 : i32, i32
  }
  func.func @transform_1(%arg0: i32) -> (i32, i32) {
    %c0_i32 = arith.constant 0 : i32
    %c0_i32_0 = arith.constant 0 : i32
    %c0_i32_1 = arith.constant 0 : i32
    return %c0_i32, %c0_i32_0 : i32, i32
  }
  func.func @transform_2(%arg0: i32) -> (i32, i32) {
    %c0_i32 = arith.constant 0 : i32
    %c0_i32_0 = arith.constant 0 : i32
    %c0_i32_1 = arith.constant 0 : i32
    return %c0_i32, %c0_i32_0 : i32, i32
  }
  func.func @transform_3(%arg0: i32) -> (i32, i32) {
    %c0_i32 = arith.constant 0 : i32
    %c0_i32_0 = arith.constant 0 : i32
    %c0_i32_1 = arith.constant 0 : i32
    return %c0_i32, %c0_i32_0 : i32, i32
  }
  func.func @transform_4(%arg0: i32) -> (i32, i32) {
    %c0_i32 = arith.constant 0 : i32
    %c0_i32_0 = arith.constant 0 : i32
    %c0_i32_1 = arith.constant 0 : i32
    return %c0_i32, %c0_i32_0 : i32, i32
  }
  func.func @transform_5(%arg0: i32) -> (i32, i32) {
    %c0_i32 = arith.constant 0 : i32
    %c0_i32_0 = arith.constant 0 : i32
    return %arg0, %c0_i32 : i32, i32
  }
}

</mosaic_0001>

<llo_original>
// kernel: tpu_custom_call.1
$region0: #{tpu_custom_call.1}
  #allocation0 [shape = 'u32[]', space=smem, size = 0x4, offset = 0x4, fixed_abs, tag = 'smem constant byte address 0x4 - core index']
  #allocation1 [shape = 'u32[72,128]{1,0:T(1,128)}', space=vmem, size = 0x9000, scoped, tag = 'internal scratch']
  %s0 = inlined_call_operand.hbm [shape: f32[10,784], index: 0, kind: input, shape index: {}]
  %s1 = inlined_call_operand.hbm [shape: bf16[784,128], index: 1, kind: input, shape index: {}]
  %s2 = inlined_call_operand.vmem [shape: f32[1,128], index: 2, kind: input, shape index: {}]
  %s3 = inlined_call_operand.hbm [shape: bf16[128,128], index: 3, kind: input, shape index: {}]
  %s4 = inlined_call_operand.vmem [shape: f32[1,128], index: 4, kind: input, shape index: {}]
  %s5 = inlined_call_operand.hbm [shape: bf16[10,128], index: 5, kind: output, shape index: {}]
  %s6 = sld [smem:[#allocation0]]
  $region42: #{tpu_custom_call.1} parent=0
    _
  %s8 = ssub.s32 1, %s6
  %s9 = scalar_select 0, %s8, %s6
  $region1: #{tpu_custom_call.1} parent=0
    #allocation2 [shape = 'u8[57344]{0}', space=vmem, size = 0xe000, scoped, tag = 'input window, operand 0, single buffered']
    #allocation3 [shape = 's32[1]{0}', space=sflag, size = 0x4, scoped, tag = 'scoped memory for tpu_custom_call.1']
    #allocation4 [shape = 's32[1]{0}', space=sflag, size = 0x4, scoped, tag = 'scoped memory for tpu_custom_call.1']
    #allocation5 [shape = 'u8[200704]{0}', space=vmem, size = 0x31000, scoped, tag = 'input window, operand 1, single buffered']
    #allocation6 [shape = 's32[1]{0}', space=sflag, size = 0x4, scoped, tag = 'scoped memory for tpu_custom_call.1']
    #allocation7 [shape = 'u8[32768]{0}', space=vmem, size = 0x8000, scoped, tag = 'input window, operand 3, single buffered']
    #allocation8 [shape = 'u8[4096]{0}', space=vmem, size = 0x1000, scoped, tag = 'output window, operand 0, single buffered']
    %10 = vsyncpa [#allocation3], 0
    %11 = vsyncpa [#allocation6], 0
    %12 = vsyncpa [#allocation4], 0
    // Predicated region
    $region2: #{tpu_custom_call.1} parent=1 // pred_check
      _
    $region3: #{tpu_custom_call.1} parent=1 // pred_check_branch
      %14 = sbr.rel (0) target = $region5
    $region4: #{tpu_custom_call.1} parent=1 // pred_region
      %16 = vsyncadd [#allocation3], 0
      %s17 = sshll.u32 %s0, 4
      %s18 = int_to_ptr.hbm [resolvable:$true] %s17
      %s19 = sshll.u32 [#allocation2], 4
      %s20 = int_to_ptr.vmem [resolvable:$true] %s19
      %25 = dma.hbm_to_vmem [thread:$0]  %s18, 1792, %s20, [#allocation3], 896, 896, 56
    $region5: #{tpu_custom_call.1} parent=1 // pred_fallthru
      _
    // Predicated region
    $region6: #{tpu_custom_call.1} parent=1 // pred_check
      _
    $region7: #{tpu_custom_call.1} parent=1 // pred_check_branch
      %27 = sbr.rel (0) target = $region9
    $region8: #{tpu_custom_call.1} parent=1 // pred_region
      %29 = vsyncadd [#allocation6], 0
      %s30 = sshll.u32 %s1, 4
      %s31 = int_to_ptr.hbm [resolvable:$true] %s30
      %s32 = sshll.u32 [#allocation5], 4
      %s33 = int_to_ptr.vmem [resolvable:$true] %s32
      %38 = dma.hbm_to_vmem [thread:$0]  %s31, 6272, %s33, [#allocation6], 64, 64, 4
    $region9: #{tpu_custom_call.1} parent=1 // pred_fallthru
      _
    // Predicated region
    $region10: #{tpu_custom_call.1} parent=1 // pred_check
      _
    $region11: #{tpu_custom_call.1} parent=1 // pred_check_branch
      %40 = sbr.rel (0) target = $region13
    $region12: #{tpu_custom_call.1} parent=1 // pred_region
      _
    $region13: #{tpu_custom_call.1} parent=1 // pred_fallthru
      _
    // Predicated region
    $region14: #{tpu_custom_call.1} parent=1 // pred_check
      _
    $region15: #{tpu_custom_call.1} parent=1 // pred_check_branch
      %42 = sbr.rel (0) target = $region17
    $region16: #{tpu_custom_call.1} parent=1 // pred_region
      %44 = vsyncadd [#allocation6], 0
      %s45 = sshll.u32 %s3, 4
      %s46 = int_to_ptr.hbm [resolvable:$true] %s45
      %s47 = sshll.u32 [#allocation7], 4
      %s48 = int_to_ptr.vmem [resolvable:$true] %s47
      %53 = dma.hbm_to_vmem [thread:$0]  %s46, 1024, %s48, [#allocation6], 64, 64, 4
    $region17: #{tpu_custom_call.1} parent=1 // pred_fallthru
      _
    // Predicated region
    $region18: #{tpu_custom_call.1} parent=1 // pred_check
      _
    $region19: #{tpu_custom_call.1} parent=1 // pred_check_branch
      %55 = sbr.rel (0) target = $region21
    $region20: #{tpu_custom_call.1} parent=1 // pred_region
      _
    $region21: #{tpu_custom_call.1} parent=1 // pred_fallthru
      _
    // Predicated region
    $region22: #{tpu_custom_call.1} parent=1 // pred_check
      _
    $region23: #{tpu_custom_call.1} parent=1 // pred_check_branch
      %57 = sbr.rel (0) target = $region25
    $region24: #{tpu_custom_call.1} parent=1 // pred_region
      %59 = dma.done [#allocation3], 1792
    $region25: #{tpu_custom_call.1} parent=1 // pred_fallthru
      _
    // Predicated region
    $region26: #{tpu_custom_call.1} parent=1 // pred_check
      _
    $region27: #{tpu_custom_call.1} parent=1 // pred_check_branch
      %61 = sbr.rel (0) target = $region29
    $region28: #{tpu_custom_call.1} parent=1 // pred_region
      %63 = dma.done [#allocation6], 6272
    $region29: #{tpu_custom_call.1} parent=1 // pred_fallthru
      _
    // Predicated region
    $region30: #{tpu_custom_call.1} parent=1 // pred_check
      _
    $region31: #{tpu_custom_call.1} parent=1 // pred_check_branch
      %65 = sbr.rel (0) target = $region33
    $region32: #{tpu_custom_call.1} parent=1 // pred_region
      %67 = dma.done [#allocation6], 1024
    $region33: #{tpu_custom_call.1} parent=1 // pred_fallthru
      _
    %v69 = vld [vmem:[#allocation2] sm:$0xff]
    %v70 = vld [vmem:[#allocation2 + $0x8] sm:$0xff]
    %v71 = vld [vmem:[#allocation2 + $0x10] sm:$0xff]
    %v72 = vld [vmem:[#allocation2 + $0x18] sm:$0xff]
    %v73 = vld [vmem:[#allocation2 + $0x20] sm:$0xff]
    %v74 = vld [vmem:[#allocation2 + $0x28] sm:$0xff]
    %v75 = vld [vmem:[#allocation2 + $0x30] sm:$0xff]
    %v76 = vld [vmem:[#allocation2 + $0x38] sm:$0xff]
    %v77 = vld [vmem:[#allocation2 + $0x40] sm:$0xff]
    %v78 = vld [vmem:[#allocation2 + $0x48] sm:$0xff]
    %v79 = vld [vmem:[#allocation2 + $0x50] sm:$0xff]
    %v80 = vld [vmem:[#allocation2 + $0x58] sm:$0xff]
    %v81 = vld [vmem:[#allocation2 + $0x60] sm:$0xff]
    %v82 = vld [vmem:[#allocation2 + $0x68] sm:$0xff]
    %v83 = vpack.c.bf16 %v76, %v69
    %v84 = vpack.c.bf16 %v77, %v70
    %v85 = vpack.c.bf16 %v78, %v71
    %v86 = vpack.c.bf16 %v79, %v72
    %v87 = vpack.c.bf16 %v80, %v73
    %v88 = vpack.c.bf16 %v81, %v74
    %v89 = vpack.c.bf16 %v82, %v75
    %v90 = vld [vmem:[#allocation5] sm:$0xf]
    %v91 = vld [vmem:[#allocation5 + $0x4] sm:$0xf]
    %v92 = vld [vmem:[#allocation5 + $0x8] sm:$0xf]
    %v93 = vld [vmem:[#allocation5 + $0xc] sm:$0xf]
    %v94 = vld [vmem:[#allocation5 + $0x10] sm:$0xf]
    %v95 = vld [vmem:[#allocation5 + $0x14] sm:$0xf]
    %v96 = vld [vmem:[#allocation5 + $0x18] sm:$0xf]
    %v97 = vld [vmem:[#allocation5 + $0x1c] sm:$0xf]
    %v98 = vld [vmem:[#allocation5 + $0x20] sm:$0xf]
    %v99 = vld [vmem:[#allocation5 + $0x24] sm:$0xf]
    %v100 = vld [vmem:[#allocation5 + $0x28] sm:$0xf]
    %v101 = vld [vmem:[#allocation5 + $0x2c] sm:$0xf]
    %v102 = vld [vmem:[#allocation5 + $0x30] sm:$0xf]
    %v103 = vld [vmem:[#allocation5 + $0x34] sm:$0xf]
    %v104 = vld [vmem:[#allocation5 + $0x38] sm:$0xf]
    %v105 = vld [vmem:[#allocation5 + $0x3c] sm:$0xf]
    %v106 = vld [vmem:[#allocation5 + $0x40] sm:$0xf]
    %v107 = vld [vmem:[#allocation5 + $0x44] sm:$0xf]
    %v108 = vld [vmem:[#allocation5 + $0x48] sm:$0xf]
    %v109 = vld [vmem:[#allocation5 + $0x4c] sm:$0xf]
    %v110 = vld [vmem:[#allocation5 + $0x50] sm:$0xf]
    %v111 = vld [vmem:[#allocation5 + $0x54] sm:$0xf]
    %v112 = vld [vmem:[#allocation5 + $0x58] sm:$0xf]
    %v113 = vld [vmem:[#allocation5 + $0x5c] sm:$0xf]
    %v114 = vld [vmem:[#allocation5 + $0x60] sm:$0xf]
    %v115 = vld [vmem:[#allocation5 + $0x64] sm:$0xf]
    %v116 = vld [vmem:[#allocation5 + $0x68] sm:$0xf]
    %v117 = vld [vmem:[#allocation5 + $0x6c] sm:$0xf]
    %v118 = vld [vmem:[#allocation5 + $0x70] sm:$0xf]
    %v119 = vld [vmem:[#allocation5 + $0x74] sm:$0xf]
    %v120 = vld [vmem:[#allocation5 + $0x78] sm:$0xf]
    %v121 = vld [vmem:[#allocation5 + $0x7c] sm:$0xf]
    %v122 = vld [vmem:[#allocation5 + $0x80] sm:$0xf]
    %v123 = vld [vmem:[#allocation5 + $0x84] sm:$0xf]
    %v124 = vld [vmem:[#allocation5 + $0x88] sm:$0xf]
    %v125 = vld [vmem:[#allocation5 + $0x8c] sm:$0xf]
    %v126 = vld [vmem:[#allocation5 + $0x90] sm:$0xf]
    %v127 = vld [vmem:[#allocation5 + $0x94] sm:$0xf]
    %v128 = vld [vmem:[#allocation5 + $0x98] sm:$0xf]
    %v129 = vld [vmem:[#allocation5 + $0x9c] sm:$0xf]
    %v130 = vld [vmem:[#allocation5 + $0xa0] sm:$0xf]
    %v131 = vld [vmem:[#allocation5 + $0xa4] sm:$0xf]
    %v132 = vld [vmem:[#allocation5 + $0xa8] sm:$0xf]
    %v133 = vld [vmem:[#allocation5 + $0xac] sm:$0xf]
    %v134 = vld [vmem:[#allocation5 + $0xb0] sm:$0xf]
    %v135 = vld [vmem:[#allocation5 + $0xb4] sm:$0xf]
    %v136 = vld [vmem:[#allocation5 + $0xb8] sm:$0xf]
    %v137 = vld [vmem:[#allocation5 + $0xbc] sm:$0xf]
    %v138 = vld [vmem:[#allocation5 + $0xc0] sm:$0xf]
    %v139 = vld [vmem:[#allocation5 + $0xc4] sm:$0xf]
    %v140 = vld [vmem:[#allocation5 + $0xc8] sm:$0xf]
    %v141 = vld [vmem:[#allocation5 + $0xcc] sm:$0xf]
    %v142 = vld [vmem:[#allocation5 + $0xd0] sm:$0xf]
    %v143 = vld [vmem:[#allocation5 + $0xd4] sm:$0xf]
    %v144 = vld [vmem:[#allocation5 + $0xd8] sm:$0xf]
    %v145 = vld [vmem:[#allocation5 + $0xdc] sm:$0xf]
    %v146 = vld [vmem:[#allocation5 + $0xe0] sm:$0xf]
    %v147 = vld [vmem:[#allocation5 + $0xe4] sm:$0xf]
    %v148 = vld [vmem:[#allocation5 + $0xe8] sm:$0xf]
    %v149 = vld [vmem:[#allocation5 + $0xec] sm:$0xf]
    %v150 = vld [vmem:[#allocation5 + $0xf0] sm:$0xf]
    %v151 = vld [vmem:[#allocation5 + $0xf4] sm:$0xf]
    %v152 = vld [vmem:[#allocation5 + $0xf8] sm:$0xf]
    %v153 = vld [vmem:[#allocation5 + $0xfc] sm:$0xf]
    %v154 = vld [vmem:[#allocation5 + $0x100] sm:$0xf]
    %v155 = vld [vmem:[#allocation5 + $0x104] sm:$0xf]
    %v156 = vld [vmem:[#allocation5 + $0x108] sm:$0xf]
    %v157 = vld [vmem:[#allocation5 + $0x10c] sm:$0xf]
    %v158 = vld [vmem:[#allocation5 + $0x110] sm:$0xf]
    %v159 = vld [vmem:[#allocation5 + $0x114] sm:$0xf]
    %v160 = vld [vmem:[#allocation5 + $0x118] sm:$0xf]
    %v161 = vld [vmem:[#allocation5 + $0x11c] sm:$0xf]
    %v162 = vld [vmem:[#allocation5 + $0x120] sm:$0xf]
    %v163 = vld [vmem:[#allocation5 + $0x124] sm:$0xf]
    %v164 = vld [vmem:[#allocation5 + $0x128] sm:$0xf]
    %v165 = vld [vmem:[#allocation5 + $0x12c] sm:$0xf]
    %v166 = vld [vmem:[#allocation5 + $0x130] sm:$0xf]
    %v167 = vld [vmem:[#allocation5 + $0x134] sm:$0xf]
    %v168 = vld [vmem:[#allocation5 + $0x138] sm:$0xf]
    %v169 = vld [vmem:[#allocation5 + $0x13c] sm:$0xf]
    %v170 = vld [vmem:[#allocation5 + $0x140] sm:$0xf]
    %v171 = vld [vmem:[#allocation5 + $0x144] sm:$0xf]
    %v172 = vld [vmem:[#allocation5 + $0x148] sm:$0xf]
    %v173 = vld [vmem:[#allocation5 + $0x14c] sm:$0xf]
    %v174 = vld [vmem:[#allocation5 + $0x150] sm:$0xf]
    %v175 = vld [vmem:[#allocation5 + $0x154] sm:$0xf]
    %v176 = vld [vmem:[#allocation5 + $0x158] sm:$0xf]
    %v177 = vld [vmem:[#allocation5 + $0x15c] sm:$0xf]
    %v178 = vld [vmem:[#allocation5 + $0x160] sm:$0xf]
    %v179 = vld [vmem:[#allocation5 + $0x164] sm:$0xf]
    %v180 = vld [vmem:[#allocation5 + $0x168] sm:$0xf]
    %v181 = vld [vmem:[#allocation5 + $0x16c] sm:$0xf]
    %v182 = vld [vmem:[#allocation5 + $0x170] sm:$0xf]
    %v183 = vld [vmem:[#allocation5 + $0x174] sm:$0xf]
    %v184 = vld [vmem:[#allocation5 + $0x178] sm:$0xf]
    %v185 = vld [vmem:[#allocation5 + $0x17c] sm:$0xf]
    %v186 = vld [vmem:[#allocation5 + $0x180] sm:$0xf]
    %v187 = vld [vmem:[#allocation5 + $0x184] sm:$0xf]
    %v188 = vld [vmem:[%s2] sm:$0x1]
    %v190 = vperm.slane %v188, 0
    %v290 = vunpack.c.l.b16 %v90
    %v291 = vunpack.c.l.b16 %v91
    %v292 = vunpack.c.l.b16 %v92
    %v293 = vunpack.c.l.b16 %v93
    %v294 = vunpack.c.l.b16 %v94
    %v295 = vunpack.c.l.b16 %v95
    %v296 = vunpack.c.l.b16 %v96
    %v297 = vunpack.c.l.b16 %v97
    %v298 = vunpack.c.l.b16 %v98
    %v299 = vunpack.c.l.b16 %v99
    %v300 = vunpack.c.l.b16 %v100
    %v301 = vunpack.c.l.b16 %v101
    %v302 = vunpack.c.l.b16 %v102
    %v303 = vunpack.c.l.b16 %v103
    %v304 = vunpack.c.l.b16 %v104
    %v305 = vunpack.c.l.b16 %v105
    %v306 = vunpack.c.l.b16 %v106
    %v307 = vunpack.c.l.b16 %v107
    %v308 = vunpack.c.l.b16 %v108
    %v309 = vunpack.c.l.b16 %v109
    %v310 = vunpack.c.l.b16 %v110
    %v311 = vunpack.c.l.b16 %v111
    %v312 = vunpack.c.l.b16 %v112
    %v313 = vunpack.c.l.b16 %v113
    %v314 = vunpack.c.l.b16 %v114
    %v315 = vunpack.c.l.b16 %v115
    %v316 = vunpack.c.l.b16 %v116
    %v317 = vunpack.c.l.b16 %v117
    %v318 = vunpack.c.l.b16 %v118
    %v319 = vunpack.c.l.b16 %v119
    %v320 = vunpack.c.l.b16 %v120
    %v321 = vunpack.c.l.b16 %v121
    %v322 = vunpack.c.l.b16 %v122
    %v323 = vunpack.c.l.b16 %v123
    %v324 = vunpack.c.l.b16 %v124
    %v325 = vunpack.c.l.b16 %v125
    %v326 = vunpack.c.l.b16 %v126
    %v327 = vunpack.c.l.b16 %v127
    %v328 = vunpack.c.l.b16 %v128
    %v329 = vunpack.c.l.b16 %v129
    %v330 = vunpack.c.l.b16 %v130
    %v331 = vunpack.c.l.b16 %v131
    %v332 = vunpack.c.l.b16 %v132
    %v333 = vunpack.c.l.b16 %v133
    %v334 = vunpack.c.l.b16 %v134
    %v335 = vunpack.c.l.b16 %v135
    %v336 = vunpack.c.l.b16 %v136
    %v337 = vunpack.c.l.b16 %v137
    %v338 = vunpack.c.l.b16 %v138
    %v339 = vunpack.c.l.b16 %v139
    %v340 = vunpack.c.l.b16 %v140
    %v341 = vunpack.c.l.b16 %v141
    %v342 = vunpack.c.l.b16 %v142
    %v343 = vunpack.c.l.b16 %v143
    %v344 = vunpack.c.l.b16 %v144
    %v345 = vunpack.c.l.b16 %v145
    %v346 = vunpack.c.l.b16 %v146
    %v347 = vunpack.c.l.b16 %v147
    %v348 = vunpack.c.l.b16 %v148
    %v349 = vunpack.c.l.b16 %v149
    %v350 = vunpack.c.l.b16 %v150
    %v351 = vunpack.c.l.b16 %v151
    %v352 = vunpack.c.l.b16 %v152
    %v353 = vunpack.c.l.b16 %v153
    %v354 = vunpack.c.l.b16 %v154
    %v355 = vunpack.c.l.b16 %v155
    %v356 = vunpack.c.l.b16 %v156
    %v357 = vunpack.c.l.b16 %v157
    %v358 = vunpack.c.l.b16 %v158
    %v359 = vunpack.c.l.b16 %v159
    %v360 = vunpack.c.l.b16 %v160
    %v361 = vunpack.c.l.b16 %v161
    %v362 = vunpack.c.l.b16 %v162
    %v363 = vunpack.c.l.b16 %v163
    %v364 = vunpack.c.l.b16 %v164
    %v365 = vunpack.c.l.b16 %v165
    %v366 = vunpack.c.l.b16 %v166
    %v367 = vunpack.c.l.b16 %v167
    %v368 = vunpack.c.l.b16 %v168
    %v369 = vunpack.c.l.b16 %v169
    %v370 = vunpack.c.l.b16 %v170
    %v371 = vunpack.c.l.b16 %v171
    %v372 = vunpack.c.l.b16 %v172
    %v373 = vunpack.c.l.b16 %v173
    %v374 = vunpack.c.l.b16 %v174
    %v375 = vunpack.c.l.b16 %v175
    %v376 = vunpack.c.l.b16 %v176
    %v377 = vunpack.c.l.b16 %v177
    %v378 = vunpack.c.l.b16 %v178
    %v379 = vunpack.c.l.b16 %v179
    %v380 = vunpack.c.l.b16 %v180
    %v381 = vunpack.c.l.b16 %v181
    %v382 = vunpack.c.l.b16 %v182
    %v383 = vunpack.c.l.b16 %v183
    %v384 = vunpack.c.l.b16 %v184
    %v385 = vunpack.c.l.b16 %v185
    %v386 = vunpack.c.l.b16 %v186
    %v387 = vunpack.c.l.b16 %v187
    %v388 = vpack.c.b16 %v291, %v290
    %v389 = vpack.c.b16 %v293, %v292
    %v390 = vpack.c.b16 %v295, %v294
    %v391 = vpack.c.b16 %v297, %v296
    %v392 = vpack.c.b16 %v299, %v298
    %v393 = vpack.c.b16 %v301, %v300
    %v394 = vpack.c.b16 %v303, %v302
    %v395 = vpack.c.b16 %v305, %v304
    %v396 = vpack.c.b16 %v307, %v306
    %v397 = vpack.c.b16 %v309, %v308
    %v398 = vpack.c.b16 %v311, %v310
    %v399 = vpack.c.b16 %v313, %v312
    %v400 = vpack.c.b16 %v315, %v314
    %v401 = vpack.c.b16 %v317, %v316
    %v402 = vpack.c.b16 %v319, %v318
    %v403 = vpack.c.b16 %v321, %v320
    %v404 = vpack.c.b16 %v323, %v322
    %v405 = vpack.c.b16 %v325, %v324
    %v406 = vpack.c.b16 %v327, %v326
    %v407 = vpack.c.b16 %v329, %v328
    %v408 = vpack.c.b16 %v331, %v330
    %v409 = vpack.c.b16 %v333, %v332
    %v410 = vpack.c.b16 %v335, %v334
    %v411 = vpack.c.b16 %v337, %v336
    %v412 = vpack.c.b16 %v339, %v338
    %v413 = vpack.c.b16 %v341, %v340
    %v414 = vpack.c.b16 %v343, %v342
    %v415 = vpack.c.b16 %v345, %v344
    %v416 = vpack.c.b16 %v347, %v346
    %v417 = vpack.c.b16 %v349, %v348
    %v418 = vpack.c.b16 %v351, %v350
    %v419 = vpack.c.b16 %v353, %v352
    %v420 = vpack.c.b16 %v355, %v354
    %v421 = vpack.c.b16 %v357, %v356
    %v422 = vpack.c.b16 %v359, %v358
    %v423 = vpack.c.b16 %v361, %v360
    %v424 = vpack.c.b16 %v363, %v362
    %v425 = vpack.c.b16 %v365, %v364
    %v426 = vpack.c.b16 %v367, %v366
    %v427 = vpack.c.b16 %v369, %v368
    %v428 = vpack.c.b16 %v371, %v370
    %v429 = vpack.c.b16 %v373, %v372
    %v430 = vpack.c.b16 %v375, %v374
    %v431 = vpack.c.b16 %v377, %v376
    %v432 = vpack.c.b16 %v379, %v378
    %v433 = vpack.c.b16 %v381, %v380
    %v434 = vpack.c.b16 %v383, %v382
    %v435 = vpack.c.b16 %v385, %v384
    %v436 = vpack.c.b16 %v387, %v386
    %vm486 = vcmask 130048
    %v488 = vsel %vm486, %v89, 0
    %490 = vmatpush.bf16.msra.mxu0 %v395
    %491 = vmatpush.bf16.msra.mxu0 %v394
    %492 = vmatpush.bf16.msra.mxu0 %v393
    %493 = vmatpush.bf16.msra.mxu0 %v392
    %494 = vmatpush.bf16.msra.mxu0 %v391
    %495 = vmatpush.bf16.msra.mxu0 %v390
    %496 = vmatpush.bf16.msra.mxu0 %v389
    %497 = vmatpush.bf16.msra.mxu0 %v388
    %498 = vmatmul.bf16.gmra.mxu0 %v83
    %v499 = vpop.f32.mrf.mxu0
    %v500 = vadd.f32 %v190, %v499
    %v501 = vpop.f32.mrf.mxu0
    %v502 = vadd.f32 %v190, %v501
    %503 = vdwg.mxu0
    %504 = vmatpush.bf16.msra.mxu0 %v403
    %505 = vmatpush.bf16.msra.mxu0 %v402
    %506 = vmatpush.bf16.msra.mxu0 %v401
    %507 = vmatpush.bf16.msra.mxu0 %v400
    %508 = vmatpush.bf16.msra.mxu0 %v399
    %509 = vmatpush.bf16.msra.mxu0 %v398
    %510 = vmatpush.bf16.msra.mxu0 %v397
    %511 = vmatpush.bf16.msra.mxu0 %v396
    %512 = vmatmul.bf16.gmra.mxu0 %v84
    %v513 = vpop.f32.mrf.mxu0
    %v514 = vadd.f32 %v500, %v513
    %v515 = vpop.f32.mrf.mxu0
    %v516 = vadd.f32 %v502, %v515
    %517 = vdwg.mxu0
    %518 = vmatpush.bf16.msra.mxu0 %v411
    %519 = vmatpush.bf16.msra.mxu0 %v410
    %520 = vmatpush.bf16.msra.mxu0 %v409
    %521 = vmatpush.bf16.msra.mxu0 %v408
    %522 = vmatpush.bf16.msra.mxu0 %v407
    %523 = vmatpush.bf16.msra.mxu0 %v406
    %524 = vmatpush.bf16.msra.mxu0 %v405
    %525 = vmatpush.bf16.msra.mxu0 %v404
    %526 = vmatmul.bf16.gmra.mxu0 %v85
    %v527 = vpop.f32.mrf.mxu0
    %v528 = vadd.f32 %v514, %v527
    %v529 = vpop.f32.mrf.mxu0
    %v530 = vadd.f32 %v516, %v529
    %531 = vdwg.mxu0
    %532 = vmatpush.bf16.msra.mxu0 %v419
    %533 = vmatpush.bf16.msra.mxu0 %v418
    %534 = vmatpush.bf16.msra.mxu0 %v417
    %535 = vmatpush.bf16.msra.mxu0 %v416
    %536 = vmatpush.bf16.msra.mxu0 %v415
    %537 = vmatpush.bf16.msra.mxu0 %v414
    %538 = vmatpush.bf16.msra.mxu0 %v413
    %539 = vmatpush.bf16.msra.mxu0 %v412
    %540 = vmatmul.bf16.gmra.mxu0 %v86
    %v541 = vpop.f32.mrf.mxu0
    %v542 = vadd.f32 %v528, %v541
    %v543 = vpop.f32.mrf.mxu0
    %v544 = vadd.f32 %v530, %v543
    %545 = vdwg.mxu0
    %546 = vmatpush.bf16.msra.mxu0 %v427
    %547 = vmatpush.bf16.msra.mxu0 %v426
    %548 = vmatpush.bf16.msra.mxu0 %v425
    %549 = vmatpush.bf16.msra.mxu0 %v424
    %550 = vmatpush.bf16.msra.mxu0 %v423
    %551 = vmatpush.bf16.msra.mxu0 %v422
    %552 = vmatpush.bf16.msra.mxu0 %v421
    %553 = vmatpush.bf16.msra.mxu0 %v420
    %554 = vmatmul.bf16.gmra.mxu0 %v87
    %v555 = vpop.f32.mrf.mxu0
    %v556 = vadd.f32 %v542, %v555
    %v557 = vpop.f32.mrf.mxu0
    %v558 = vadd.f32 %v544, %v557
    %559 = vdwg.mxu0
    %560 = vmatpush.bf16.msra.mxu0 %v435
    %561 = vmatpush.bf16.msra.mxu0 %v434
    %562 = vmatpush.bf16.msra.mxu0 %v433
    %563 = vmatpush.bf16.msra.mxu0 %v432
    %564 = vmatpush.bf16.msra.mxu0 %v431
    %565 = vmatpush.bf16.msra.mxu0 %v430
    %566 = vmatpush.bf16.msra.mxu0 %v429
    %567 = vmatpush.bf16.msra.mxu0 %v428
    %568 = vmatmul.bf16.gmra.mxu0 %v88
    %v569 = vpop.f32.mrf.mxu0
    %v570 = vadd.f32 %v556, %v569
    %v571 = vpop.f32.mrf.mxu0
    %v572 = vadd.f32 %v558, %v571
    %573 = vdwg.mxu0
    %574 = vmatpush.bf16.msra.mxu0 0
    %575 = vmatpush.bf16.msra.mxu0 0
    %576 = vmatpush.bf16.msra.mxu0 0
    %577 = vmatpush.bf16.msra.mxu0 0
    %578 = vmatpush.bf16.msra.mxu0 0
    %579 = vmatpush.bf16.msra.mxu0 0
    %580 = vmatpush.bf16.msra.mxu0 0
    %581 = vmatpush.bf16.msra.mxu0 %v436
    %582 = vmatmul.bf16.gmra.mxu0 %v488
    %v583 = vpop.f32.mrf.mxu0
    %v584 = vadd.f32 %v570, %v583
    %v585 = vpop.f32.mrf.mxu0
    %v586 = vadd.f32 %v572, %v585
    %587 = vdwg.mxu0
    %v588 = vmax.f32 %v584, 0.0
    %v589 = vmax.f32 %v586, 0.0
    %v590 = vpack.c.bf16 %v589, %v588
    %v591 = vld [vmem:[#allocation7] sm:$0xf]
    %v592 = vld [vmem:[#allocation7 + $0x4] sm:$0xf]
    %v593 = vld [vmem:[#allocation7 + $0x8] sm:$0xf]
    %v594 = vld [vmem:[#allocation7 + $0xc] sm:$0xf]
    %v595 = vld [vmem:[#allocation7 + $0x10] sm:$0xf]
    %v596 = vld [vmem:[#allocation7 + $0x14] sm:$0xf]
    %v597 = vld [vmem:[#allocation7 + $0x18] sm:$0xf]
    %v598 = vld [vmem:[#allocation7 + $0x1c] sm:$0xf]
    %v599 = vld [vmem:[#allocation7 + $0x20] sm:$0xf]
    %v600 = vld [vmem:[#allocation7 + $0x24] sm:$0xf]
    %v601 = vld [vmem:[#allocation7 + $0x28] sm:$0xf]
    %v602 = vld [vmem:[#allocation7 + $0x2c] sm:$0xf]
    %v603 = vld [vmem:[#allocation7 + $0x30] sm:$0xf]
    %v604 = vld [vmem:[#allocation7 + $0x34] sm:$0xf]
    %v605 = vld [vmem:[#allocation7 + $0x38] sm:$0xf]
    %v606 = vld [vmem:[#allocation7 + $0x3c] sm:$0xf]
    %v607 = vld [vmem:[%s4] sm:$0x1]
    %v609 = vperm.slane %v607, 0
    %v627 = vunpack.c.l.b16 %v591
    %v628 = vunpack.c.l.b16 %v592
    %v629 = vunpack.c.l.b16 %v593
    %v630 = vunpack.c.l.b16 %v594
    %v631 = vunpack.c.l.b16 %v595
    %v632 = vunpack.c.l.b16 %v596
    %v633 = vunpack.c.l.b16 %v597
    %v634 = vunpack.c.l.b16 %v598
    %v635 = vunpack.c.l.b16 %v599
    %v636 = vunpack.c.l.b16 %v600
    %v637 = vunpack.c.l.b16 %v601
    %v638 = vunpack.c.l.b16 %v602
    %v639 = vunpack.c.l.b16 %v603
    %v640 = vunpack.c.l.b16 %v604
    %v641 = vunpack.c.l.b16 %v605
    %v642 = vunpack.c.l.b16 %v606
    %v643 = vpack.c.b16 %v628, %v627
    %v644 = vpack.c.b16 %v630, %v629
    %v645 = vpack.c.b16 %v632, %v631
    %v646 = vpack.c.b16 %v634, %v633
    %v647 = vpack.c.b16 %v636, %v635
    %v648 = vpack.c.b16 %v638, %v637
    %v649 = vpack.c.b16 %v640, %v639
    %v650 = vpack.c.b16 %v642, %v641
    %659 = vmatpush.bf16.msra.mxu0 %v650
    %660 = vmatpush.bf16.msra.mxu0 %v649
    %661 = vmatpush.bf16.msra.mxu0 %v648
    %662 = vmatpush.bf16.msra.mxu0 %v647
    %663 = vmatpush.bf16.msra.mxu0 %v646
    %664 = vmatpush.bf16.msra.mxu0 %v645
    %665 = vmatpush.bf16.msra.mxu0 %v644
    %666 = vmatpush.bf16.msra.mxu0 %v643
    %667 = vmatmul.bf16.gmra.mxu0 %v590
    %v668 = vpop.f32.mrf.mxu0
    %v669 = vadd.f32 %v609, %v668
    %v670 = vpop.f32.mrf.mxu0
    %v671 = vadd.f32 %v609, %v670
    %672 = vdwg.mxu0
    %v673 = vpack.c.bf16 %v669, %v669
    %v674 = vpack.c.bf16 %v671, %v671
    %675 = vst [vmem:[#allocation8] sm:$0xf] %v673
    %676 = vst [vmem:[#allocation8 + $0x4] sm:$0xf] %v674
    // Predicated region
    $region34: #{tpu_custom_call.1} parent=1 // pred_check
      _
    $region35: #{tpu_custom_call.1} parent=1 // pred_check_branch
      %678 = sbr.rel (0) target = $region37
    $region36: #{tpu_custom_call.1} parent=1 // pred_region
      %680 = vsyncadd [#allocation4], 0
      %s681 = sshll.u32 [#allocation8], 4
      %s682 = int_to_ptr.vmem [resolvable:$true] %s681
      %s683 = sshll.u32 %s5, 4
      %s684 = int_to_ptr.hbm [resolvable:$true] %s683
      %689 = dma.vmem_to_hbm [thread:$0]  %s682, 128, %s684, [#allocation4], 64, 64, 4
    $region37: #{tpu_custom_call.1} parent=1 // pred_fallthru
      _
    // Predicated region
    $region38: #{tpu_custom_call.1} parent=1 // pred_check
      _
    $region39: #{tpu_custom_call.1} parent=1 // pred_check_branch
      %691 = sbr.rel (0) target = $region41
    $region40: #{tpu_custom_call.1} parent=1 // pred_region
      %693 = dma.done [#allocation4], 128
    $region41: #{tpu_custom_call.1} parent=1 // pred_fallthru
      _
    %694 = vsyncpa [#allocation3], 1
    %695 = vsyncpa [#allocation6], 1
    %696 = vsyncpa [#allocation4], 1

</llo_original>
